<compile_context>
chip_gen: v5e
topology: v5e:2x2
jax: 0.10.0
libtpu: 0.0.40
codegen_flags: <defaults>
</compile_context>

<pallas_src>
import functools

import jax
import jax.numpy as jnp
import numpy as np
from jax.experimental import pallas as pl
from jax.experimental.pallas import tpu as pltpu

NEG_INF = -jnp.inf
_VMEM_LIMIT = 64 * 1024 * 1024        # <= physical VMEM on v5e / v6e / v7x


# ----------------------------------------------------------------------------
# Tiled linear projection kernel (used for the key projection).
# ----------------------------------------------------------------------------
def _linear_kernel(x_ref, w_ref, b_ref, o_ref):
    # bf16 operands into the MXU, f32 accumulation.
    o_ref[0] = (jnp.dot(x_ref[0].astype(jnp.bfloat16), w_ref[...],
                        preferred_element_type=jnp.float32)
                + b_ref[...]).astype(o_ref.dtype)


def linear_project(x, w_t, b_row):
    """x: [B, T, H] f32 @ w_t: [H, Ho] bf16 + b_row: [1, Ho] f32 -> [B, T, Ho] f32."""
    B, T, H = x.shape
    Ho = w_t.shape[1]
    tT = T if T <= 512 else 512
    n_t = pl.cdiv(T, tT)
    return pl.pallas_call(
        _linear_kernel,
        out_shape=jax.ShapeDtypeStruct((B, T, Ho), jnp.float32),
        grid=(B, n_t),
        in_specs=[pl.BlockSpec((1, tT, H), lambda b, t: (b, t, 0)),
                  pl.BlockSpec((H, Ho), lambda b, t: (0, 0)),     # resident weight
                  pl.BlockSpec((1, Ho), lambda b, t: (0, 0))],    # resident bias
        out_specs=pl.BlockSpec((1, tT, Ho), lambda b, t: (b, t, 0)),
        compiler_params=pltpu.CompilerParams(
            dimension_semantics=("parallel", "parallel"),
            vmem_limit_bytes=_VMEM_LIMIT),
        cost_estimate=pl.CostEstimate(
            flops=2 * B * T * H * Ho, transcendentals=0,
            bytes_accessed=B * T * (H * 4 + Ho * 4) + H * Ho * 2),
    )(x, w_t, b_row)


# ----------------------------------------------------------------------------
# Fused attention-weights kernel: Q projection + per-head Q K^T (+ mask).
# Grid: (batch, S-tiles); every step is independent -> both axes parallel.
# ----------------------------------------------------------------------------
def _attention_tile(q_ref, wq_ref, bq_ref, kpt_ref, mask_ref, w_ref, qp_ref,
                    *, num_heads, dim_head):
    # Q projection of this (batch, S-tile): bf16 MXU operands, f32 accumulation.
    # The 1/sqrt(dim_head) scale is already folded into wq/bq.
    qp = jnp.dot(q_ref[0].astype(jnp.bfloat16), wq_ref[...],
                 preferred_element_type=jnp.float32) + bq_ref[...]
    qp_ref[...] = qp.astype(qp_ref.dtype)               # bf16 scratch [tS, H]

    # Per-head [tS, dh] @ [dh, T] matmuls.  kpt is already [H, T], so the head
    # slices are sublane slices and no per-head transpose is needed.
    # TODO(synk): for dim_head < 128 the MXU contraction depth is underused; a
    # head-padded (dh -> 128) weight layout would fix this at the cost of VMEM.
    for n in range(num_heads):
        lo = n * dim_head
        qn = qp_ref[:, lo:lo + dim_head]                 # [tS, dh] bf16
        kn = kpt_ref[0, lo:lo + dim_head, :]             # [dh, T]  bf16
        w = jnp.dot(qn, kn, preferred_element_type=jnp.float32)
        if mask_ref is not None:
            # Re-load the mask each head so its live range is one iteration.
            w = jnp.where(mask_ref[0] != 0, NEG_INF, w)
        w_ref[0, n] = w.astype(w_ref.dtype)


def _attn_kernel_masked(q_ref, wq_ref, bq_ref, kpt_ref, mask_ref, w_ref, qp_ref,
                        *, num_heads, dim_head):
    _attention_tile(q_ref, wq_ref, bq_ref, kpt_ref, mask_ref, w_ref, qp_ref,
                    num_heads=num_heads, dim_head=dim_head)


def _attn_kernel_nomask(q_ref, wq_ref, bq_ref, kpt_ref, w_ref, qp_ref,
                        *, num_heads, dim_head):
    _attention_tile(q_ref, wq_ref, bq_ref, kpt_ref, None, w_ref, qp_ref,
                    num_heads=num_heads, dim_head=dim_head)


def _pick_s_tile(S, num_heads, T, out_bytes):
    # Keep the double-buffered [1, N, tS, T] output block comfortably inside VMEM
    # on every generation (v7x: 64 MiB total): target <= 8 MiB per output buffer.
    budget = 8 * 1024 * 1024
    t = budget // max(1, num_heads * T * out_bytes)
    if t >= S:
        return S
    return max(8, (t // 8) * 8)


def attention_weights(query, kpt, wq_t, bq_row, mask_i8, *, num_heads, dim_head,
                      batch_size, out_dtype):
    """query [Bq,S,H] f32, kpt [Bk,H,T] bf16, mask [B,S,T] int8|None -> [B,N,S,T]."""
    Bq, S, H = query.shape
    Bk, _, T = kpt.shape
    B = batch_size
    out_bytes = np.dtype(out_dtype).itemsize
    tS = _pick_s_tile(S, num_heads, T, out_bytes)
    n_s = pl.cdiv(S, tS)

    q_map = (lambda b, s: (b, s, 0)) if Bq == B else (lambda b, s: (0, s, 0))
    k_map = (lambda b, s: (b, 0, 0)) if Bk == B else (lambda b, s: (0, 0, 0))

    in_specs = [pl.BlockSpec((1, tS, H), q_map),
                pl.BlockSpec((H, H), lambda b, s: (0, 0)),     # wq_t (bf16), resident
                pl.BlockSpec((1, H), lambda b, s: (0, 0)),     # bq (f32), resident
                pl.BlockSpec((1, H, T), k_map)]                # projected key^T (bf16)
    args = [query, wq_t, bq_row, kpt]
    if mask_i8 is not None:
        kernel = functools.partial(_attn_kernel_masked,
                                   num_heads=num_heads, dim_head=dim_head)
        in_specs.append(pl.BlockSpec((1, tS, T), lambda b, s: (b, s, 0)))
        args.append(mask_i8)
        mask_bytes = B * S * T
    else:
        kernel = functools.partial(_attn_kernel_nomask,
                                   num_heads=num_heads, dim_head=dim_head)
        mask_bytes = 0

    return pl.pallas_call(
        kernel,
        out_shape=jax.ShapeDtypeStruct((B, num_heads, S, T), out_dtype),
        grid=(B, n_s),
        in_specs=in_specs,
        out_specs=pl.BlockSpec((1, num_heads, tS, T), lambda b, s: (b, 0, s, 0)),
        scratch_shapes=[pltpu.VMEM((tS, H), jnp.bfloat16)],
        compiler_params=pltpu.CompilerParams(
            dimension_semantics=("parallel", "parallel"),
            vmem_limit_bytes=_VMEM_LIMIT),
        cost_estimate=pl.CostEstimate(
            flops=2 * B * S * H * (H + T), transcendentals=0,
            bytes_accessed=(Bq * S * H * 4 + H * H * 2 + B * n_s * H * T * 2
                            + mask_bytes + B * num_heads * S * T * out_bytes)),
    )(*args)


# ----------------------------------------------------------------------------
# Module wrapper (mirrors MultiheadAttentionWeights.forward)
# ----------------------------------------------------------------------------
class MultiheadAttentionWeightsPallas:
    def __init__(self, hidden_dim=32, num_heads=4, key=None,
                 weights_dtype=jnp.float32):
        assert hidden_dim % num_heads == 0
        self.hidden_dim = hidden_dim
        self.num_heads = num_heads
        self.dim_head = hidden_dim // num_heads
        self.sqrt_dim = float(self.dim_head) ** 0.5
        # v5e tip: pass weights_dtype=jnp.bfloat16 if downstream tolerates bf16
        # logits (halves the dominant HBM writeback); default f32 for exactness.
        self.weights_dtype = weights_dtype
        if key is None:
            key = jax.random.PRNGKey(0)
        kq_w, kq_b, kk_w, kk_b = jax.random.split(key, 4)
        bound = 1.0 / (hidden_dim ** 0.5)              # PyTorch nn.Linear default init
        wq = jax.random.uniform(kq_w, (hidden_dim, hidden_dim), jnp.float32, -bound, bound)
        bq = jax.random.uniform(kq_b, (hidden_dim,), jnp.float32, -bound, bound)
        wk = jax.random.uniform(kk_w, (hidden_dim, hidden_dim), jnp.float32, -bound, bound)
        bk = jax.random.uniform(kk_b, (hidden_dim,), jnp.float32, -bound, bound)
        # Pre-transpose to [in, out] (no in-kernel .T), fold 1/sqrt(dh) into the
        # Q-side parameters, and store the matmul weights in bf16 (MXU-native).
        self.wq_t = (wq.T / self.sqrt_dim).astype(jnp.bfloat16)
        self.bq_row = (bq / self.sqrt_dim).reshape(1, hidden_dim).astype(jnp.float32)
        self.wk_t = wk.T.astype(jnp.bfloat16)
        self.bk_row = bk.reshape(1, hidden_dim).astype(jnp.float32)

    def __call__(self, query, key=None, key_ignorance_mask=None, attention_mask=None,
                 prev_key=None, head_at_last=True, is_self=False):
        if key is None:
            key = query
        assert query.shape[0] == key.shape[0] or key.shape[0] == 1 or query.shape[0] == 1
        B = max(query.shape[0], key.shape[0])
        H, N, dh = self.hidden_dim, self.num_heads, self.dim_head
        S = query.shape[1]

        if prev_key is None:
            # Project the key once per distinct batch row (handles the Bk==1
            # broadcast without redundant per-batch recomputation).
            kp = linear_project(key, self.wk_t, self.bk_row)           # [Bk,T,H] f32
            # TODO(synk): emit this bf16 [B,H,T] layout directly from the
            # projection kernel to save one small HBM pass.
            kpt = jnp.swapaxes(kp.astype(jnp.bfloat16), 1, 2)          # [Bk,H,T] bf16
            k_out = kp if kp.shape[0] == B else jnp.broadcast_to(kp, (B,) + kp.shape[1:])
        elif is_self:
            kp_new = linear_project(key, self.wk_t, self.bk_row)
            if kp_new.shape[0] != B:
                kp_new = jnp.broadcast_to(kp_new, (B,) + kp_new.shape[1:])
            pk = prev_key if prev_key.shape[0] == B else \
                jnp.broadcast_to(prev_key, (B,) + prev_key.shape[1:])
            k_out = jnp.concatenate([pk, kp_new], axis=1)
            kpt = jnp.swapaxes(k_out.astype(jnp.bfloat16), 1, 2)
        else:
            # Already projected: no copy, no re-projection, no HBM rewrite.
            k_out = prev_key
            kpt = jnp.swapaxes(prev_key.astype(jnp.bfloat16), 1, 2)

        T = kpt.shape[2]
        assert key_ignorance_mask is None or key_ignorance_mask.shape == (B, T)
        assert attention_mask is None or attention_mask.shape == (S, T)

        # OR-combine both masks once in XLA; ship as int8 (4x less DMA than int32).
        if attention_mask is None and key_ignorance_mask is None:
            mask_i8 = None                       # no-mask kernel variant, no mask DMA
        else:
            am = (jnp.zeros((S, T), bool) if attention_mask is None
                  else attention_mask.astype(bool))
            kim = (jnp.zeros((B, T), bool) if key_ignorance_mask is None
                   else key_ignorance_mask.astype(bool))
            mask_i8 = (am[None, :, :] | kim[:, None, :]).astype(jnp.int8)

        w = attention_weights(query, kpt, self.wq_t, self.bq_row, mask_i8,
                              num_heads=N, dim_head=dh, batch_size=B,
                              out_dtype=self.weights_dtype)
        if head_at_last:
            # TODO(synk): skip this extra HBM pass when the consumer accepts [B,N,S,T].
            w = jnp.transpose(w, (0, 2, 3, 1))
        return w, k_out


# ----------------------------------------------------------------------------
# Reference (plain JAX) mirroring the kernel's bf16-operand / f32-accum math.
# ----------------------------------------------------------------------------
def reference(module, query, key=None, key_ignorance_mask=None, attention_mask=None,
              prev_key=None, head_at_last=True, is_self=False):
    bf16 = jnp.bfloat16
    if key is None:
        key = query
    B = max(query.shape[0], key.shape[0])
    N, dh = module.num_heads, module.dim_head

    qp = jnp.einsum("bsh,hk->bsk", query.astype(bf16), module.wq_t,
                    preferred_element_type=jnp.float32) + module.bq_row
    if qp.shape[0] == 1 and B > 1:
        qp = jnp.broadcast_to(qp, (B,) + qp.shape[1:])

    if prev_key is None:
        kp = jnp.einsum("bth,hk->btk", key.astype(bf16), module.wk_t,
                        preferred_element_type=jnp.float32) + module.bk_row
        if kp.shape[0] == 1 and B > 1:
            kp = jnp.broadcast_to(kp, (B,) + kp.shape[1:])
        k_out = kp
    elif is_self:
        kp_new = jnp.einsum("bth,hk->btk", key.astype(bf16), module.wk_t,
                            preferred_element_type=jnp.float32) + module.bk_row
        if kp_new.shape[0] == 1 and B > 1:
            kp_new = jnp.broadcast_to(kp_new, (B,) + kp_new.shape[1:])
        pk = prev_key if prev_key.shape[0] == B else \
            jnp.broadcast_to(prev_key, (B,) + prev_key.shape[1:])
        k_out = jnp.concatenate([pk, kp_new], axis=1)
    else:
        k_out = prev_key

    S, T = qp.shape[1], k_out.shape[1]
    qh = qp.astype(bf16).reshape(B, S, N, dh).transpose(0, 2, 1, 3)
    kh = k_out.astype(bf16).reshape(B, T, N, dh).transpose(0, 2, 1, 3)
    w = jnp.einsum("bnsd,bntd->bnst", qh, kh, preferred_element_type=jnp.float32)
    if attention_mask is not None:
        w = jnp.where(attention_mask[None, None].astype(bool), NEG_INF, w)
    if key_ignorance_mask is not None:
        w = jnp.where(key_ignorance_mask[:, None, None, :].astype(bool), NEG_INF, w)
    w = w.astype(module.weights_dtype)
    if head_at_last:
        w = jnp.transpose(w, (0, 2, 3, 1))
    return w, k_out


if __name__ == "__main__":
    B, S, T, H, N = 2, 8, 8, 32, 4
    root = jax.random.PRNGKey(0)
    k_param, k_q, k_x, k_kim, k_am = jax.random.split(root, 5)

    module = MultiheadAttentionWeightsPallas(hidden_dim=H, num_heads=N, key=k_param)

    query = jax.random.normal(k_q, (B, S, H), jnp.float32)
    key = jax.random.normal(k_x, (B, T, H), jnp.float32)
    key_ignorance_mask = jax.random.bernoulli(k_kim, 0.2, (B, T))
    attention_mask = jax.random.bernoulli(k_am, 0.2, (S, T))

    RTOL = ATOL = 2e-2   # bf16 MXU operands, f32 accumulation (matched in reference)

    # 1) cross-attention with both masks, head_at_last=True
    weights, proj_key = module(query, key,
                               key_ignorance_mask=key_ignorance_mask,
                               attention_mask=attention_mask,
                               head_at_last=True)
    weights = jax.block_until_ready(weights)
    proj_key = jax.block_until_ready(proj_key)
    w_ref, k_ref = reference(module, query, key, key_ignorance_mask,
                             attention_mask, head_at_last=True)
    assert weights.shape == (B, S, T, N)
    assert np.allclose(np.asarray(weights), np.asarray(w_ref), rtol=RTOL, atol=ATOL)
    assert np.allclose(np.asarray(proj_key), np.asarray(k_ref), rtol=RTOL, atol=ATOL)

    # 2) self-attention (key=None), no masks, head_at_last=False (no-mask variant)
    w2, k2 = module(query, None, head_at_last=False)
    w2 = jax.block_until_ready(w2)
    w2_ref, k2_ref = reference(module, query, None, head_at_last=False)
    assert w2.shape == (B, N, S, S)
    assert np.allclose(np.asarray(w2), np.asarray(w2_ref), rtol=RTOL, atol=ATOL)
    assert np.allclose(np.asarray(k2), np.asarray(k2_ref), rtol=RTOL, atol=ATOL)

    # 3) broadcast key (batch 1): K projection hoisted, index_map batch-broadcast
    key1 = key[:1]
    w4, k4 = module(query, key1, key_ignorance_mask=key_ignorance_mask,
                    head_at_last=False)
    w4 = jax.block_until_ready(w4)
    w4_ref, k4_ref = reference(module, query, key1, key_ignorance_mask,
                               head_at_last=False)
    assert w4.shape == (B, N, S, T)
    assert np.allclose(np.asarray(w4), np.asarray(w4_ref), rtol=RTOL, atol=ATOL)
    assert np.allclose(np.asarray(k4), np.asarray(k4_ref), rtol=RTOL, atol=ATOL)

    # 4) prev_key + is_self (concatenated pre-projected key, no kout rewrite)
    w3, k3 = module(query, key, prev_key=proj_key, head_at_last=False, is_self=True)
    w3 = jax.block_until_ready(w3)
    w3_ref, k3_ref = reference(module, query, key, prev_key=proj_key,
                               head_at_last=False, is_self=True)
    assert w3.shape == (B, N, S, 2 * T)
    assert np.allclose(np.asarray(w3), np.asarray(w3_ref), rtol=RTOL, atol=ATOL)
    assert np.allclose(np.asarray(k3), np.asarray(k3_ref), rtol=RTOL, atol=ATOL)

    print("KERNEL_OK")
</pallas_src>

<mosaic_0001>
module attributes {stable_mosaic.version = 11 : i64} {
  func.func @_linear_kernel(%arg0: i32, %arg1: i32, %arg2: memref<1x8x32xf32, #tpu.memory_space<vmem>>, %arg3: memref<32x32xbf16, #tpu.memory_space<vmem>>, %arg4: memref<1x32xf32, #tpu.memory_space<vmem>>, %arg5: memref<1x8x32xf32, #tpu.memory_space<vmem>>) attributes {dimension_semantics = [#tpu.dimension_semantics<parallel>, #tpu.dimension_semantics<parallel>], iteration_bounds = array<i64: 2, 1>, scalar_prefetch = 0 : i64, scratch_operands = 0 : i64, tpu.core_type = #tpu.core_type<tc>, window_params = [{transform_indices = @transform_0, window_bounds = array<i64: 1, 8, 32>}, {pipeline_mode = #tpu.pipeline_mode<synchronous>, transform_indices = @transform_1, window_bounds = array<i64: 32, 32>}, {pipeline_mode = #tpu.pipeline_mode<synchronous>, transform_indices = @transform_2, window_bounds = array<i64: 1, 32>}, {transform_indices = @transform_3, window_bounds = array<i64: 1, 8, 32>}]} {
    %c0 = arith.constant 0 : index
    %c0_0 = arith.constant 0 : index
    %c0_1 = arith.constant 0 : index
    %0 = vector.load %arg2[%c0, %c0_0, %c0_1] : memref<1x8x32xf32, #tpu.memory_space<vmem>>, vector<1x8x32xf32>
    %1 = vector.shape_cast %0 : vector<1x8x32xf32> to vector<8x32xf32>
    %2 = arith.truncf %1 : vector<8x32xf32> to vector<8x32xbf16>
    %c0_2 = arith.constant 0 : index
    %c0_3 = arith.constant 0 : index
    %3 = vector.load %arg3[%c0_2, %c0_3] : memref<32x32xbf16, #tpu.memory_space<vmem>>, vector<32x32xbf16>
    %cst = arith.constant dense<0.000000e+00> : vector<8x32xf32>
    %4 = tpu.matmul %2, %3, %cst {dimension_numbers = #tpu.dot_dimension_numbers<[1], [0], [0], [1], [0, 0, 1, 1], [], []>} : vector<8x32xbf16>, vector<32x32xbf16>, vector<8x32xf32> -> vector<8x32xf32>
    %c0_4 = arith.constant 0 : index
    %c0_5 = arith.constant 0 : index
    %5 = vector.load %arg4[%c0_4, %c0_5] : memref<1x32xf32, #tpu.memory_space<vmem>>, vector<1x32xf32>
    %6 = vector.broadcast %5 : vector<1x32xf32> to vector<8x32xf32>
    %7 = arith.addf %4, %6 : vector<8x32xf32>
    %c0_6 = arith.constant 0 : index
    %c0_7 = arith.constant 0 : index
    %c0_8 = arith.constant 0 : index
    %8 = vector.load %arg5[%c0_6, %c0_7, %c0_8] : memref<1x8x32xf32, #tpu.memory_space<vmem>>, vector<1x8x32xf32>
    %9 = vector.shape_cast %8 : vector<1x8x32xf32> to vector<8x32xf32>
    %10 = vector.shape_cast %7 : vector<8x32xf32> to vector<1x8x32xf32>
    tpu.vector_store %arg5[%c0_6, %c0_7, %c0_8], %10 {strides = array<i32>} : memref<1x8x32xf32, #tpu.memory_space<vmem>>, vector<1x8x32xf32>,
    return
  }
  func.func @transform_0(%arg0: i32, %arg1: i32) -> (i32, i32, i32) {
    %c0_i32 = arith.constant 0 : i32
    %c0_i32_0 = arith.constant 0 : i32
    return %arg0, %arg1, %c0_i32 : i32, i32, i32
  }
  func.func @transform_1(%arg0: i32, %arg1: i32) -> (i32, i32) {
    %c0_i32 = arith.constant 0 : i32
    %c0_i32_0 = arith.constant 0 : i32
    %c0_i32_1 = arith.constant 0 : i32
    return %c0_i32, %c0_i32_0 : i32, i32
  }
  func.func @transform_2(%arg0: i32, %arg1: i32) -> (i32, i32) {
    %c0_i32 = arith.constant 0 : i32
    %c0_i32_0 = arith.constant 0 : i32
    %c0_i32_1 = arith.constant 0 : i32
    return %c0_i32, %c0_i32_0 : i32, i32
  }
  func.func @transform_3(%arg0: i32, %arg1: i32) -> (i32, i32, i32) {
    %c0_i32 = arith.constant 0 : i32
    %c0_i32_0 = arith.constant 0 : i32
    return %arg0, %arg1, %c0_i32 : i32, i32, i32
  }
}

</mosaic_0001>

<llo_original>
// kernel: tpu_custom_call.1
$region0: #{tpu_custom_call.1}
  #allocation0 [shape = 'u32[]', space=smem, size = 0x4, offset = 0x4, fixed_abs, tag = 'smem constant byte address 0x4 - core index']
  #allocation1 [shape = 'u32[72,128]{1,0:T(1,128)}', space=vmem, size = 0x9000, scoped, tag = 'internal scratch']
  %s0 = inlined_call_operand.hbm [shape: f32[2,8,32], index: 0, kind: input, shape index: {}]
  %s1 = inlined_call_operand.hbm [shape: bf16[32,32], index: 1, kind: input, shape index: {}]
  %s2 = inlined_call_operand.vmem [shape: f32[1,32], index: 2, kind: input, shape index: {}]
  %s3 = inlined_call_operand.hbm [shape: f32[2,8,32], index: 3, kind: output, shape index: {}]
  %s4 = sld [smem:[#allocation0]]
  $region53: #{tpu_custom_call.1} parent=0
    _
  %s6 = ssub.s32 1, %s4
  %s7 = scalar_select 0, %s6, %s4
  $region1: #{tpu_custom_call.1} parent=0
    #allocation2 [shape = 'u8[8192]{0}', space=vmem, size = 0x2000, scoped, tag = 'input window, operand 0']
    #allocation3 [shape = 's32[2]{0}', space=sflag, size = 0x8, scoped, tag = 'scoped memory for tpu_custom_call.1']
    #allocation4 [shape = 's32[2]{0}', space=sflag, size = 0x8, scoped, tag = 'scoped memory for tpu_custom_call.1']
    #allocation5 [shape = 'u8[8192]{0}', space=vmem, size = 0x2000, scoped, tag = 'input window, operand 1, single buffered']
    #allocation6 [shape = 's32[1]{0}', space=sflag, size = 0x4, scoped, tag = 'scoped memory for tpu_custom_call.1']
    #allocation7 [shape = 'u8[8192]{0}', space=vmem, size = 0x2000, scoped, tag = 'output window, operand 0']
    %8 = vsyncpa [#allocation3], 0
    %s9 = scalar_lea.sflag [#allocation3], 1
    %10 = vsyncpa %s9, 0
    %11 = vsyncpa [#allocation6], 0
    %12 = vsyncpa [#allocation4], 0
    %s13 = scalar_lea.sflag [#allocation4], 1
    %14 = vsyncpa %s13, 0
    loop: start=0, step=1, limit=4
    $region2: #{tpu_custom_call.1} parent=1 // loop_pre_header
      _
    $region3: #{tpu_custom_call.1} parent=1 // loop_header
      %s16 = sphi 0, %s20
      %p17 = scmp.ge.s32.totalorder %s16, 4
      %s23 = sphi 0, %s35
      %s24 = sphi 0, %s31
      %s25 = sphi 0, %s23
      %s26 = sphi 0, %s24
      %s27 = sphi 0, %s25
      %s28 = sphi 0, %s26
      %s40 = sphi 0, %s42
      %s43 = sphi 0, %s40
      %s44 = sphi 0, %s43
      %s60 = sphi 0, %s44
      %s64 = sphi 0, %s64
      %s66 = sphi 0, %s64
      %s67 = sphi 0, %s66
      %s81 = sphi 0, %s67
      %s85 = sphi 0, %s85
      %s87 = sphi 0, %s85
      %s88 = sphi 0, %s87
      %s102 = sphi 0, %s88
      %s110 = sphi 0, %s112
      %s113 = sphi 0, %s110
      %s114 = sphi 0, %s113
      %s130 = sphi 0, %s114
    $region4: #{tpu_custom_call.1} parent=1 // loop_header_branch
      %19 = sbr.rel (%p17) target = $region8
    $region5: #{tpu_custom_call.1} parent=1 // loop_body
      %s21 = ssub.s32 %s16, 1
      %s22 = ssub.s32 %s16, 2
      %s29 = sadd.s32 1, %s24
      %p30 = scmp.ge.s32.totalorder %s29, 1
      %s31 = scalar_select %p30, 0, %s29
      %s32 = sadd.s32 1, %s23
      %s33 = scalar_select %p30, %s32, %s23
      %p34 = scmp.ge.s32.totalorder %s33, 2
      %s35 = scalar_select %p34, 0, %s33
      %s36 = ssub.s32 %s23, %s35
      %s37 = ssub.s32 %s24, %s31
      %s38 = sor.u32 %s36, %s37
      %p39 = scmp.eq.s32.totalorder %s38, 0
      %s41 = sadd.s32 %s40, 1
      %s42 = scalar_select %p39, %s40, %s41
      %p45 = pneg %p39
      %p46 = scmp.eq.s32.totalorder %s16, 1
      %p47 = por %p45, %p46
      %p48 = scmp.ne.s32.totalorder %s40, %s43
      %p49 = scmp.eq.s32.totalorder %s16, 0
      %p50 = por %p48, %p49
      %p51 = scmp.ne.s32.totalorder %s40, %s43
      %p52 = scmp.eq.s32.totalorder %s21, 1
      %p53 = por %p51, %p52
      %p54 = scmp.ne.s32.totalorder %s43, %s44
      %p55 = scmp.eq.s32.totalorder %s21, 0
      %p56 = por %p54, %p55
      %p57 = scmp.ne.s32.totalorder %s43, %s44
      %p58 = scmp.eq.s32.totalorder %s22, 1
      %p59 = por %p57, %p58
      %p61 = scmp.ne.s32.totalorder %s44, %s60
      %p62 = scmp.eq.s32.totalorder %s22, 0
      %p63 = por %p61, %p62
      %s65 = sadd.s32 %s64, 1
      %p68 = scmp.eq.s32.totalorder %s16, 1
      %p69 = scmp.ne.s32.totalorder %s64, %s66
      %p70 = scmp.eq.s32.totalorder %s16, 0
      %p71 = por %p69, %p70
      %p72 = scmp.ne.s32.totalorder %s64, %s66
      %p73 = scmp.eq.s32.totalorder %s21, 1
      %p74 = por %p72, %p73
      %p75 = scmp.ne.s32.totalorder %s66, %s67
      %p76 = scmp.eq.s32.totalorder %s21, 0
      %p77 = por %p75, %p76
      %p78 = scmp.ne.s32.totalorder %s66, %s67
      %p79 = scmp.eq.s32.totalorder %s22, 1
      %p80 = por %p78, %p79
      %p82 = scmp.ne.s32.totalorder %s67, %s81
      %p83 = scmp.eq.s32.totalorder %s22, 0
      %p84 = por %p82, %p83
      %s86 = sadd.s32 %s85, 1
      %p89 = scmp.eq.s32.totalorder %s16, 1
      %p90 = scmp.ne.s32.totalorder %s85, %s87
      %p91 = scmp.eq.s32.totalorder %s16, 0
      %p92 = por %p90, %p91
      %p93 = scmp.ne.s32.totalorder %s85, %s87
      %p94 = scmp.eq.s32.totalorder %s21, 1
      %p95 = por %p93, %p94
      %p96 = scmp.ne.s32.totalorder %s87, %s88
      %p97 = scmp.eq.s32.totalorder %s21, 0
      %p98 = por %p96, %p97
      %p99 = scmp.ne.s32.totalorder %s87, %s88
      %p100 = scmp.eq.s32.totalorder %s22, 1
      %p101 = por %p99, %p100
      %p103 = scmp.ne.s32.totalorder %s88, %s102
      %p104 = scmp.eq.s32.totalorder %s22, 0
      %p105 = por %p103, %p104
      %s106 = ssub.s32 %s23, %s35
      %s107 = ssub.s32 %s24, %s31
      %s108 = sor.u32 %s106, %s107
      %p109 = scmp.eq.s32.totalorder %s108, 0
      %s111 = sadd.s32 %s110, 1
      %s112 = scalar_select %p109, %s110, %s111
      %p115 = pneg %p109
      %p116 = scmp.eq.s32.totalorder %s16, 1
      %p117 = por %p115, %p116
      %p118 = scmp.ne.s32.totalorder %s110, %s113
      %p119 = scmp.eq.s32.totalorder %s16, 0
      %p120 = por %p118, %p119
      %p121 = scmp.ne.s32.totalorder %s110, %s113
      %p122 = scmp.eq.s32.totalorder %s21, 1
      %p123 = por %p121, %p122
      %p124 = scmp.ne.s32.totalorder %s113, %s114
      %p125 = scmp.eq.s32.totalorder %s21, 0
      %p126 = por %p124, %p125
      %p127 = scmp.ne.s32.totalorder %s113, %s114
      %p128 = scmp.eq.s32.totalorder %s22, 1
      %p129 = por %p127, %p128
      %p131 = scmp.ne.s32.totalorder %s114, %s130
      %p132 = scmp.eq.s32.totalorder %s22, 0
      %p133 = por %p131, %p132
      %p134 = scmp.le.s32.totalorder 1, %s16
      %p135 = scmp.lt.s32.totalorder %s16, 3
      %p136 = pnand %p134, %p135
      %p137 = pneg %p136
      // Predicated region
      $region9: #{tpu_custom_call.1} parent=5 // pred_check
        _
      $region10: #{tpu_custom_call.1} parent=5 // pred_check_branch
        %139 = sbr.rel (%p136) target = $region12
      $region11: #{tpu_custom_call.1} parent=5 // pred_region
        %s140 = ssub.s32 %s16, 1
        // Predicated region
        $region13: #{tpu_custom_call.1} parent=11 // pred_check
          %p141 = pneg %p77
        $region14: #{tpu_custom_call.1} parent=11 // pred_check_branch
          %143 = sbr.rel (%p141) target = $region16
        $region15: #{tpu_custom_call.1} parent=11 // pred_region
          %145 = vsyncadd [#allocation6], 0
          %s146 = sshll.u32 %s1, 4
          %s147 = int_to_ptr.hbm [resolvable:$true] %s146
          %s148 = sshll.u32 [#allocation5], 4
          %s149 = int_to_ptr.vmem [resolvable:$true] %s148
          %154 = dma.hbm_to_vmem [thread:$0]  %s147, 256, %s149, [#allocation6], 64, 64, 4
        $region16: #{tpu_custom_call.1} parent=11 // pred_fallthru
          _
        // Predicated region
        $region17: #{tpu_custom_call.1} parent=11 // pred_check
          %p155 = pneg %p98
        $region18: #{tpu_custom_call.1} parent=11 // pred_check_branch
          %157 = sbr.rel (%p155) target = $region20
        $region19: #{tpu_custom_call.1} parent=11 // pred_region
          _
        $region20: #{tpu_custom_call.1} parent=11 // pred_fallthru
          _
      $region12: #{tpu_custom_call.1} parent=5 // pred_fallthru
        _
      %p158 = scmp.lt.s32.totalorder %s16, 2
      // Predicated region
      $region21: #{tpu_custom_call.1} parent=5 // pred_check
        %p159 = pneg %p158
      $region22: #{tpu_custom_call.1} parent=5 // pred_check_branch
        %161 = sbr.rel (%p159) target = $region24
      $region23: #{tpu_custom_call.1} parent=5 // pred_region
        // Predicated region
        $region25: #{tpu_custom_call.1} parent=23 // pred_check
          %p162 = pneg %p50
        $region26: #{tpu_custom_call.1} parent=23 // pred_check_branch
          %164 = sbr.rel (%p162) target = $region28
        $region27: #{tpu_custom_call.1} parent=23 // pred_region
          %s165 = sand.u32 %s40, 1
          %s166 = scalar_lea.sflag [#allocation3], %s165
          %s167 = sand.u32 %s40, 1
          %s168 = smul.addr %s167, 8
          %s169 = scalar_lea.vmem [#allocation2], %s168
          %171 = vsyncadd %s166, 0
          %s172 = sadd.s32 %s24, %s23
          %s173 = smul.addr %s172, 8
          %s174 = scalar_lea.hbm %s0, %s173
          %s176 = sshll.u32 %s174, 4
          %s177 = int_to_ptr.hbm [resolvable:$true] %s176
          %s178 = sshll.u32 %s169, 4
          %s179 = int_to_ptr.vmem [resolvable:$true] %s178
          %181 = dma.hbm_to_vmem [thread:$0]  %s177, 128, %s179, %s166
        $region28: #{tpu_custom_call.1} parent=23 // pred_fallthru
          _
      $region24: #{tpu_custom_call.1} parent=5 // pred_fallthru
        _
      %p182 = scmp.le.s32.totalorder 1, %s16
      %p183 = scmp.lt.s32.totalorder %s16, 3
      %p184 = pnand %p182, %p183
      %p185 = pneg %p184
      // Predicated region
      $region29: #{tpu_custom_call.1} parent=5 // pred_check
        _
      $region30: #{tpu_custom_call.1} parent=5 // pred_check_branch
        %187 = sbr.rel (%p184) target = $region32
      $region31: #{tpu_custom_call.1} parent=5 // pred_region
        %s188 = ssub.s32 %s16, 1
        %s189 = sand.u32 %s43, 1
        %s190 = scalar_lea.sflag [#allocation3], %s189
        %s191 = sand.u32 %s43, 1
        %s192 = smul.addr %s191, 8
        %s193 = scalar_lea.vmem [#allocation2], %s192
        // Predicated region
        $region33: #{tpu_custom_call.1} parent=31 // pred_check
          %p194 = pneg %p56
        $region34: #{tpu_custom_call.1} parent=31 // pred_check_branch
          %196 = sbr.rel (%p194) target = $region36
        $region35: #{tpu_custom_call.1} parent=31 // pred_region
          %198 = dma.done %s190, 128
        $region36: #{tpu_custom_call.1} parent=31 // pred_fallthru
          _
        // Predicated region
        $region37: #{tpu_custom_call.1} parent=31 // pred_check
          %p199 = pneg %p77
        $region38: #{tpu_custom_call.1} parent=31 // pred_check_branch
          %201 = sbr.rel (%p199) target = $region40
        $region39: #{tpu_custom_call.1} parent=31 // pred_region
          %203 = dma.done [#allocation6], 256
        $region40: #{tpu_custom_call.1} parent=31 // pred_fallthru
          _
        %s204 = sand.u32 %s43, 1
        %s205 = scalar_lea.sflag [#allocation3], %s204
        %s206 = sand.u32 %s43, 1
        %s207 = smul.addr %s206, 8
        %s208 = scalar_lea.vmem [#allocation2], %s207
        %p209 = pneg %p56
        %p210 = pneg %p53
        %p211 = pneg %p77
        %p212 = pneg %p74
        %p213 = pneg %p98
        %p214 = pneg %p95
        %p215 = pneg %p126
        %p216 = pneg %p123
        %s217 = sand.u32 %s113, 1
        %s218 = scalar_lea.sflag [#allocation4], %s217
        %s219 = sand.u32 %s113, 1
        %s220 = smul.addr %s219, 8
        %s221 = scalar_lea.vmem [#allocation7], %s220
        %v223 = vld [vmem:[%s193] sm:$0xff]
        %v224 = vpack.c.bf16 %v223, %v223
        %v225 = vld [vmem:[#allocation5] sm:$0xf]
        %v226 = vld [vmem:[#allocation5 + $0x4] sm:$0xf]
        %v227 = vld [vmem:[#allocation5 + $0x8] sm:$0xf]
        %v228 = vld [vmem:[#allocation5 + $0xc] sm:$0xf]
        %v229 = vld [vmem:[%s2] sm:$0x1]
        %v231 = vperm.slane %v229, 0
        %v237 = vunpack.c.l.b16 %v225
        %v238 = vunpack.c.l.b16 %v226
        %v239 = vunpack.c.l.b16 %v227
        %v240 = vunpack.c.l.b16 %v228
        %v241 = vpack.c.b16 %v238, %v237
        %v242 = vpack.c.b16 %v240, %v239
        %vm245 = vcmask 261120
        %v247 = vsel %vm245, %v224, 0
        %249 = vmatpush.bf16.msra.mxu0 0
        %250 = vmatpush.bf16.msra.mxu0 0
        %251 = vmatpush.bf16.msra.mxu0 0
        %252 = vmatpush.bf16.msra.mxu0 0
        %253 = vmatpush.bf16.msra.mxu0 0
        %254 = vmatpush.bf16.msra.mxu0 0
        %255 = vmatpush.bf16.msra.mxu0 %v242
        %256 = vmatpush.bf16.msra.mxu0 %v241
        %257 = vmatmul.bf16.gmra.mxu0 %v247
        %v258 = vpop.f32.mrf.mxu0
        %v259 = vadd.f32 %v231, %v258
        %v260 = vpop.f32.mrf.mxu0
        %261 = vdwg.mxu0
        %262 = vst.msk [vmem:[%s221] sm:$0xff] %vm245, %v259
        %s263 = sand.u32 %s113, 1
        %s264 = scalar_lea.sflag [#allocation4], %s263
        %s265 = sand.u32 %s113, 1
        %s266 = smul.addr %s265, 8
        %s267 = scalar_lea.vmem [#allocation7], %s266
        // Predicated region
        $region41: #{tpu_custom_call.1} parent=31 // pred_check
          %p268 = pneg %p123
        $region42: #{tpu_custom_call.1} parent=31 // pred_check_branch
          %270 = sbr.rel (%p268) target = $region44
        $region43: #{tpu_custom_call.1} parent=31 // pred_region
          %272 = vsyncadd %s264, 0
          %s273 = sadd.s32 %s26, %s25
          %s274 = smul.addr %s273, 8
          %s275 = scalar_lea.hbm %s3, %s274
          %s277 = sshll.u32 %s267, 4
          %s278 = int_to_ptr.vmem [resolvable:$true] %s277
          %s279 = sshll.u32 %s275, 4
          %s280 = int_to_ptr.hbm [resolvable:$true] %s279
          %282 = dma.vmem_to_hbm [thread:$0]  %s278, 128, %s280, %s264
        $region44: #{tpu_custom_call.1} parent=31 // pred_fallthru
          _
      $region32: #{tpu_custom_call.1} parent=5 // pred_fallthru
        _
      %p283 = scmp.le.s32.totalorder 2, %s16
      // Predicated region
      $region45: #{tpu_custom_call.1} parent=5 // pred_check
        %p284 = pneg %p283
      $region46: #{tpu_custom_call.1} parent=5 // pred_check_branch
        %286 = sbr.rel (%p284) target = $region48
      $region47: #{tpu_custom_call.1} parent=5 // pred_region
        %s287 = ssub.s32 %s16, 2
        // Predicated region
        $region49: #{tpu_custom_call.1} parent=47 // pred_check
          %p288 = pneg %p129
        $region50: #{tpu_custom_call.1} parent=47 // pred_check_branch
          %290 = sbr.rel (%p288) target = $region52
        $region51: #{tpu_custom_call.1} parent=47 // pred_region
          %s291 = sand.u32 %s114, 1
          %s292 = scalar_lea.sflag [#allocation4], %s291
          %s293 = sand.u32 %s114, 1
          %s294 = smul.addr %s293, 8
          %s295 = scalar_lea.vmem [#allocation7], %s294
          %297 = dma.done %s292, 128
        $region52: #{tpu_custom_call.1} parent=47 // pred_fallthru
          _
      $region48: #{tpu_custom_call.1} parent=5 // pred_fallthru
        _
    $region6: #{tpu_custom_call.1} parent=1 // loop_footer
      %s20 = sadd.s32 1, %s16
    $region7: #{tpu_custom_call.1} parent=1 // loop_footer_branch
      %15 = sbr.rel target = $region3
    $region8: #{tpu_custom_call.1} parent=1 // loop_exit
      _
    %298 = vsyncpa [#allocation3], 1
    %s299 = scalar_lea.sflag [#allocation3], 1
    %300 = vsyncpa %s299, 1
    %301 = vsyncpa [#allocation6], 1
    %302 = vsyncpa [#allocation4], 1
    %s303 = scalar_lea.sflag [#allocation4], 1
    %304 = vsyncpa %s303, 1

</llo_original>
